<compile_context>
chip_gen: v7x
topology: tpu7x:2x2x1
jax: 0.10.0
libtpu: 0.0.40
codegen_flags: <defaults>
</compile_context>

<pallas_src>
import functools

import jax
import jax.numpy as jnp
from jax.experimental import pallas as pl
from jax.experimental.pallas import tpu as pltpu

HIDDEN1 = 64
HIDDEN2 = 32


def _round_up(n, m):
    return ((n + m - 1) // m) * m


def dual_output_kernel(
    x_ref,    # [TB, D_in]   f32  (cast to bf16 in-kernel)
    w1_ref,   # [D_in, 64]   bf16
    b1_ref,   # [1, 64]      f32
    w2_ref,   # [64, 32]     bf16
    b2_ref,   # [1, 32]      f32
    wh_ref,   # [32, R+T]    bf16  (fused heads)
    bh_ref,   # [1, R+T]     f32
    out_ref,  # [TB, R+T]    f32
):
    # In-kernel f32 -> bf16 cast (VPU): no separate XLA cast pass over x in HBM.
    x = x_ref[...].astype(jnp.bfloat16)

    # fc1 + bias (f32 accumulation), cast to bf16, ReLU on bf16
    # (relu(cast(v)) == cast(relu(v)) for ReLU).  dropout1 = identity (eval).
    h1 = jnp.dot(x, w1_ref[...], preferred_element_type=jnp.float32) + b1_ref[...]
    h1 = jnp.maximum(h1.astype(jnp.bfloat16), 0)

    # fc2 + bias + ReLU.  dropout2 = identity (eval).
    h2 = jnp.dot(h1, w2_ref[...], preferred_element_type=jnp.float32) + b2_ref[...]
    h2 = jnp.maximum(h2.astype(jnp.bfloat16), 0)

    # Fused output heads (out_rain | out_temp): single [TB, R+T] matmul + store.
    out_ref[...] = (
        jnp.dot(h2, wh_ref[...], preferred_element_type=jnp.float32) + bh_ref[...]
    ).astype(out_ref.dtype)


def _vmem_bytes_estimate(TB, D_in, C):
    """Conservative per-grid-step VMEM footprint: double-buffered I/O tiles
    (minor dim padded to the native 128-lane layout) + live intermediates."""
    lane_in = _round_up(D_in, 128)
    lane_c = _round_up(C, 128)
    io = 2 * TB * lane_in * 4 + 2 * TB * lane_c * 4
    live = TB * (lane_in * 2                  # x bf16
                 + HIDDEN1 * (4 + 2)          # h1 f32 + bf16
                 + HIDDEN2 * (4 + 2)          # h2 f32 + bf16
                 + lane_c * 4)                # head result f32
    weights = 2 * ((D_in * HIDDEN1 + HIDDEN1 * HIDDEN2 + HIDDEN2 * C) * 2
                   + (HIDDEN1 + HIDDEN2 + C) * 4)
    return io + live + weights + (4 << 20)    # 4 MiB headroom


def prepare_params(params):
    """One-time prep (outside the hot path): fuse the two heads into a single
    [32, R+T] matmul and pre-cast weights to bf16.  Biases stay f32."""
    w1, b1, w2, b2, wr, br, wt, bt = params
    w_head = jnp.concatenate([wr, wt], axis=1)          # [32, R+T]
    b_head = jnp.concatenate([br, bt], axis=1)          # [1,  R+T]
    return (
        w1.astype(jnp.bfloat16), b1.astype(jnp.float32),
        w2.astype(jnp.bfloat16), b2.astype(jnp.float32),
        w_head.astype(jnp.bfloat16), b_head.astype(jnp.float32),
    )


@functools.partial(jax.jit, static_argnames=("rain_classes", "block_b"))
def dual_output_nn(x, prepared_params, rain_classes, *, block_b=8192):
    """Pallas forward pass.

    x: [B, input_size] float32.
    prepared_params: output of prepare_params(params).
    Returns (rain_logits [B, R] f32, temp_logits [B, T] f32).
    """
    w1b, b1, w2b, b2, whb, bh = prepared_params
    B, D_in = x.shape
    C = whb.shape[1]
    R = rain_classes

    # --- batch tile selection ------------------------------------------------
    blk = max(16, _round_up(block_b, 16))
    if B >= 2048:
        # Ensure >= 2 grid steps so the "parallel" batch axis can shard across
        # TensorCores (v7x) and per-step overhead stays amortized.
        blk = min(blk, _round_up(pl.cdiv(B, 2), 16))
    TB = min(blk, _round_up(B, 8))

    # Stay comfortably inside VMEM (v7x: 64 MiB per TensorCore physical).
    while TB > 512 and _vmem_bytes_estimate(TB, D_in, C) > (56 << 20):
        TB = max(512, _round_up(TB // 2, 16))
    vmem_limit = int(max(32 << 20, _vmem_bytes_estimate(TB, D_in, C)))

    # Ragged tail: cdiv grid + Pallas block masking (no pad copy, no out slice).
    grid = (pl.cdiv(B, TB),)

    cost = pl.CostEstimate(
        flops=2 * B * (D_in * HIDDEN1 + HIDDEN1 * HIDDEN2 + HIDDEN2 * C),
        transcendentals=0,
        bytes_accessed=(
            B * D_in * 4                                               # x (f32 read)
            + B * C * 4                                                # fused out (f32)
            + (D_in * HIDDEN1 + HIDDEN1 * HIDDEN2 + HIDDEN2 * C) * 2   # weights (bf16)
            + (HIDDEN1 + HIDDEN2 + C) * 4                              # biases (f32)
        ),
    )

    out = pl.pallas_call(
        dual_output_kernel,
        out_shape=jax.ShapeDtypeStruct((B, C), jnp.float32),
        grid=grid,
        in_specs=[
            pl.BlockSpec((TB, D_in), lambda i: (i, 0)),          # x: tiled along batch
            pl.BlockSpec((D_in, HIDDEN1), lambda i: (0, 0)),     # weights: VMEM-resident
            pl.BlockSpec((1, HIDDEN1), lambda i: (0, 0)),
            pl.BlockSpec((HIDDEN1, HIDDEN2), lambda i: (0, 0)),
            pl.BlockSpec((1, HIDDEN2), lambda i: (0, 0)),
            pl.BlockSpec((HIDDEN2, C), lambda i: (0, 0)),
            pl.BlockSpec((1, C), lambda i: (0, 0)),
        ],
        out_specs=pl.BlockSpec((TB, C), lambda i: (i, 0)),
        compiler_params=pltpu.CompilerParams(
            dimension_semantics=("parallel",),
            vmem_limit_bytes=vmem_limit,
        ),
        cost_estimate=cost,
    )(x.astype(jnp.float32), w1b, b1, w2b, b2, whb, bh)

    return out[:, :R], out[:, R:]


def init_params(key, input_size, rain_classes, temp_classes):
    """Deterministic init mimicking nn.Linear (uniform +/- 1/sqrt(fan_in)).
    Weights stored [in_features, out_features] (PyTorch W^T)."""
    def linear(k, fan_in, fan_out):
        kw, kb = jax.random.split(k)
        bound = 1.0 / jnp.sqrt(fan_in)
        w = jax.random.uniform(kw, (fan_in, fan_out), jnp.float32, -bound, bound)
        b = jax.random.uniform(kb, (1, fan_out), jnp.float32, -bound, bound)
        return w, b

    k1, k2, k3, k4 = jax.random.split(key, 4)
    w1, b1 = linear(k1, input_size, HIDDEN1)
    w2, b2 = linear(k2, HIDDEN1, HIDDEN2)
    wr, br = linear(k3, HIDDEN2, rain_classes)
    wt, bt = linear(k4, HIDDEN2, temp_classes)
    return (w1, b1, w2, b2, wr, br, wt, bt)


def reference_bf16(x, params):
    """Pure-JAX reference with the same bf16-input / f32-accumulation recipe
    as the kernel (eval mode: dropout = identity)."""
    w1, b1, w2, b2, wr, br, wt, bt = params
    xb = x.astype(jnp.bfloat16)
    h1 = jnp.dot(xb, w1.astype(jnp.bfloat16), preferred_element_type=jnp.float32) + b1
    h1 = jnp.maximum(h1.astype(jnp.bfloat16), 0)
    h2 = jnp.dot(h1, w2.astype(jnp.bfloat16), preferred_element_type=jnp.float32) + b2
    h2 = jnp.maximum(h2.astype(jnp.bfloat16), 0)
    rain = jnp.dot(h2, wr.astype(jnp.bfloat16), preferred_element_type=jnp.float32) + br
    temp = jnp.dot(h2, wt.astype(jnp.bfloat16), preferred_element_type=jnp.float32) + bt
    return rain, temp


def reference_f32(x, params):
    """Full-precision reference of the PyTorch forward (eval mode)."""
    w1, b1, w2, b2, wr, br, wt, bt = params
    h1 = jnp.maximum(x @ w1 + b1, 0.0)
    h2 = jnp.maximum(h1 @ w2 + b2, 0.0)
    return h2 @ wr + br, h2 @ wt + bt


if __name__ == "__main__":
    key = jax.random.PRNGKey(0)
    k_x, k_x2, k_p = jax.random.split(key, 3)

    input_size = 16
    rain_classes = 3
    temp_classes = 5

    params = init_params(k_p, input_size, rain_classes, temp_classes)
    prepared = prepare_params(params)

    # --- small batch (single grid step) ---
    batch = 8
    x = jax.random.normal(k_x, (batch, input_size), jnp.float32)
    out_rain, out_temp = dual_output_nn(x, prepared, rain_classes)
    jax.block_until_ready((out_rain, out_temp))

    ref_rain, ref_temp = reference_bf16(x, params)
    f32_rain, f32_temp = reference_f32(x, params)
    assert out_rain.shape == (batch, rain_classes)
    assert out_temp.shape == (batch, temp_classes)
    assert jnp.allclose(out_rain, ref_rain, atol=1e-3, rtol=1e-3)
    assert jnp.allclose(out_temp, ref_temp, atol=1e-3, rtol=1e-3)
    # bf16 inputs vs full-f32 reference: loose tolerance only (precision choice).
    assert jnp.allclose(out_rain, f32_rain, atol=5e-2, rtol=5e-2)
    assert jnp.allclose(out_temp, f32_temp, atol=5e-2, rtol=5e-2)

    # --- ragged batch: multiple grid steps + masked partial last block ---
    batch2 = 200
    x2 = jax.random.normal(k_x2, (batch2, input_size), jnp.float32)
    out_rain2, out_temp2 = dual_output_nn(x2, prepared, rain_classes, block_b=64)
    jax.block_until_ready((out_rain2, out_temp2))

    ref_rain2, ref_temp2 = reference_bf16(x2, params)
    assert out_rain2.shape == (batch2, rain_classes)
    assert out_temp2.shape == (batch2, temp_classes)
    assert jnp.allclose(out_rain2, ref_rain2, atol=1e-3, rtol=1e-3)
    assert jnp.allclose(out_temp2, ref_temp2, atol=1e-3, rtol=1e-3)

    # --- same ragged batch through the default (large-tile) path ---
    out_rain3, out_temp3 = dual_output_nn(x2, prepared, rain_classes)
    jax.block_until_ready((out_rain3, out_temp3))
    assert jnp.allclose(out_rain3, ref_rain2, atol=1e-3, rtol=1e-3)
    assert jnp.allclose(out_temp3, ref_temp2, atol=1e-3, rtol=1e-3)

    print("KERNEL_OK")
</pallas_src>

<mosaic_0001>
module attributes {stable_mosaic.version = 11 : i64} {
  func.func @dual_output_kernel(%arg0: i32, %arg1: memref<8x16xf32, #tpu.memory_space<vmem>>, %arg2: memref<16x64xbf16, #tpu.memory_space<vmem>>, %arg3: memref<1x64xf32, #tpu.memory_space<vmem>>, %arg4: memref<64x32xbf16, #tpu.memory_space<vmem>>, %arg5: memref<1x32xf32, #tpu.memory_space<vmem>>, %arg6: memref<32x8xbf16, #tpu.memory_space<vmem>>, %arg7: memref<1x8xf32, #tpu.memory_space<vmem>>, %arg8: memref<8x8xf32, #tpu.memory_space<vmem>>) attributes {dimension_semantics = [#tpu.dimension_semantics<parallel>], iteration_bounds = array<i64: 1>, scalar_prefetch = 0 : i64, scratch_operands = 0 : i64, tpu.core_type = #tpu.core_type<tc>, window_params = [{transform_indices = @transform_0, window_bounds = array<i64: 8, 16>}, {pipeline_mode = #tpu.pipeline_mode<synchronous>, transform_indices = @transform_1, window_bounds = array<i64: 16, 64>}, {pipeline_mode = #tpu.pipeline_mode<synchronous>, transform_indices = @transform_2, window_bounds = array<i64: 1, 64>}, {pipeline_mode = #tpu.pipeline_mode<synchronous>, transform_indices = @transform_3, window_bounds = array<i64: 64, 32>}, {pipeline_mode = #tpu.pipeline_mode<synchronous>, transform_indices = @transform_4, window_bounds = array<i64: 1, 32>}, {pipeline_mode = #tpu.pipeline_mode<synchronous>, transform_indices = @transform_5, window_bounds = array<i64: 32, 8>}, {pipeline_mode = #tpu.pipeline_mode<synchronous>, transform_indices = @transform_6, window_bounds = array<i64: 1, 8>}, {transform_indices = @transform_7, window_bounds = array<i64: 8, 8>}]} {
    %c0 = arith.constant 0 : index
    %c0_0 = arith.constant 0 : index
    %0 = vector.load %arg1[%c0, %c0_0] : memref<8x16xf32, #tpu.memory_space<vmem>>, vector<8x16xf32>
    %1 = arith.truncf %0 : vector<8x16xf32> to vector<8x16xbf16>
    %c0_1 = arith.constant 0 : index
    %c0_2 = arith.constant 0 : index
    %2 = vector.load %arg2[%c0_1, %c0_2] : memref<16x64xbf16, #tpu.memory_space<vmem>>, vector<16x64xbf16>
    %cst = arith.constant dense<0.000000e+00> : vector<8x64xf32>
    %3 = tpu.matmul %1, %2, %cst {dimension_numbers = #tpu.dot_dimension_numbers<[1], [0], [0], [1], [0, 0, 1, 1], [], []>} : vector<8x16xbf16>, vector<16x64xbf16>, vector<8x64xf32> -> vector<8x64xf32>
    %c0_3 = arith.constant 0 : index
    %c0_4 = arith.constant 0 : index
    %4 = vector.load %arg3[%c0_3, %c0_4] : memref<1x64xf32, #tpu.memory_space<vmem>>, vector<1x64xf32>
    %5 = vector.broadcast %4 : vector<1x64xf32> to vector<8x64xf32>
    %6 = arith.addf %3, %5 : vector<8x64xf32>
    %7 = arith.truncf %6 : vector<8x64xf32> to vector<8x64xbf16>
    %cst_5 = arith.constant 0.000000e+00 : bf16
    %8 = vector.broadcast %cst_5 : bf16 to vector<8x64xbf16>
    %9 = arith.maximumf %7, %8 : vector<8x64xbf16>
    %c0_6 = arith.constant 0 : index
    %c0_7 = arith.constant 0 : index
    %10 = vector.load %arg4[%c0_6, %c0_7] : memref<64x32xbf16, #tpu.memory_space<vmem>>, vector<64x32xbf16>
    %cst_8 = arith.constant dense<0.000000e+00> : vector<8x32xf32>
    %11 = tpu.matmul %9, %10, %cst_8 {dimension_numbers = #tpu.dot_dimension_numbers<[1], [0], [0], [1], [0, 0, 1, 1], [], []>} : vector<8x64xbf16>, vector<64x32xbf16>, vector<8x32xf32> -> vector<8x32xf32>
    %c0_9 = arith.constant 0 : index
    %c0_10 = arith.constant 0 : index
    %12 = vector.load %arg5[%c0_9, %c0_10] : memref<1x32xf32, #tpu.memory_space<vmem>>, vector<1x32xf32>
    %13 = vector.broadcast %12 : vector<1x32xf32> to vector<8x32xf32>
    %14 = arith.addf %11, %13 : vector<8x32xf32>
    %15 = arith.truncf %14 : vector<8x32xf32> to vector<8x32xbf16>
    %cst_11 = arith.constant 0.000000e+00 : bf16
    %16 = vector.broadcast %cst_11 : bf16 to vector<8x32xbf16>
    %17 = arith.maximumf %15, %16 : vector<8x32xbf16>
    %c0_12 = arith.constant 0 : index
    %c0_13 = arith.constant 0 : index
    %18 = vector.load %arg6[%c0_12, %c0_13] : memref<32x8xbf16, #tpu.memory_space<vmem>>, vector<32x8xbf16>
    %cst_14 = arith.constant dense<0.000000e+00> : vector<8x8xf32>
    %19 = tpu.matmul %17, %18, %cst_14 {dimension_numbers = #tpu.dot_dimension_numbers<[1], [0], [0], [1], [0, 0, 1, 1], [], []>} : vector<8x32xbf16>, vector<32x8xbf16>, vector<8x8xf32> -> vector<8x8xf32>
    %c0_15 = arith.constant 0 : index
    %c0_16 = arith.constant 0 : index
    %20 = vector.load %arg7[%c0_15, %c0_16] : memref<1x8xf32, #tpu.memory_space<vmem>>, vector<1x8xf32>
    %21 = vector.broadcast %20 : vector<1x8xf32> to vector<8x8xf32>
    %22 = arith.addf %19, %21 : vector<8x8xf32>
    %c0_17 = arith.constant 0 : index
    %c0_18 = arith.constant 0 : index
    %23 = vector.load %arg8[%c0_17, %c0_18] : memref<8x8xf32, #tpu.memory_space<vmem>>, vector<8x8xf32>
    tpu.vector_store %arg8[%c0_17, %c0_18], %22 {strides = array<i32>} : memref<8x8xf32, #tpu.memory_space<vmem>>, vector<8x8xf32>,
    return
  }
  func.func @transform_0(%arg0: i32) -> (i32, i32) {
    %c0_i32 = arith.constant 0 : i32
    %c0_i32_0 = arith.constant 0 : i32
    return %arg0, %c0_i32 : i32, i32
  }
  func.func @transform_1(%arg0: i32) -> (i32, i32) {
    %c0_i32 = arith.constant 0 : i32
    %c0_i32_0 = arith.constant 0 : i32
    %c0_i32_1 = arith.constant 0 : i32
    return %c0_i32, %c0_i32_0 : i32, i32
  }
  func.func @transform_2(%arg0: i32) -> (i32, i32) {
    %c0_i32 = arith.constant 0 : i32
    %c0_i32_0 = arith.constant 0 : i32
    %c0_i32_1 = arith.constant 0 : i32
    return %c0_i32, %c0_i32_0 : i32, i32
  }
  func.func @transform_3(%arg0: i32) -> (i32, i32) {
    %c0_i32 = arith.constant 0 : i32
    %c0_i32_0 = arith.constant 0 : i32
    %c0_i32_1 = arith.constant 0 : i32
    return %c0_i32, %c0_i32_0 : i32, i32
  }
  func.func @transform_4(%arg0: i32) -> (i32, i32) {
    %c0_i32 = arith.constant 0 : i32
    %c0_i32_0 = arith.constant 0 : i32
    %c0_i32_1 = arith.constant 0 : i32
    return %c0_i32, %c0_i32_0 : i32, i32
  }
  func.func @transform_5(%arg0: i32) -> (i32, i32) {
    %c0_i32 = arith.constant 0 : i32
    %c0_i32_0 = arith.constant 0 : i32
    %c0_i32_1 = arith.constant 0 : i32
    return %c0_i32, %c0_i32_0 : i32, i32
  }
  func.func @transform_6(%arg0: i32) -> (i32, i32) {
    %c0_i32 = arith.constant 0 : i32
    %c0_i32_0 = arith.constant 0 : i32
    %c0_i32_1 = arith.constant 0 : i32
    return %c0_i32, %c0_i32_0 : i32, i32
  }
  func.func @transform_7(%arg0: i32) -> (i32, i32) {
    %c0_i32 = arith.constant 0 : i32
    %c0_i32_0 = arith.constant 0 : i32
    return %arg0, %c0_i32 : i32, i32
  }
}

</mosaic_0001>

<llo_original>
// kernel: dual_output_nn.1
$region0: #{dual_output_nn.1}
  #allocation0 [shape = 'u32[]', space=smem, size = 0x4, offset = 0x4, fixed_abs, tag = 'smem constant byte address 0x4 - core index']
  #allocation1 [shape = 'u32[144,128]{1,0:T(1,128)}', space=vmem, size = 0x12000, scoped, tag = 'internal scratch']
  %s0 = inlined_call_operand.vmem [shape: f32[8,16], index: 0, kind: input, shape index: {}]
  %s1 = inlined_call_operand.vmem [shape: bf16[16,64], index: 1, kind: input, shape index: {}]
  %s2 = inlined_call_operand.vmem [shape: f32[1,64], index: 2, kind: input, shape index: {}]
  %s3 = inlined_call_operand.vmem [shape: bf16[64,32], index: 3, kind: input, shape index: {}]
  %s4 = inlined_call_operand.vmem [shape: f32[1,32], index: 4, kind: input, shape index: {}]
  %s5 = inlined_call_operand.vmem [shape: bf16[32,8], index: 5, kind: input, shape index: {}]
  %s6 = inlined_call_operand.vmem [shape: f32[1,8], index: 6, kind: input, shape index: {}]
  %s7 = inlined_call_operand.vmem [shape: f32[8,8], index: 7, kind: output, shape index: {}]
  %s8 = sld [smem:[#allocation0]]
  $region38: #{dual_output_nn.1} parent=0
    _
  %s10 = ssub.s32 1, %s8
  %s11 = scalar_select 0, %s10, %s8
  // Predicated region
  $region2: #{dual_output_nn.1} parent=0 // pred_check
    _
  $region3: #{dual_output_nn.1} parent=0 // pred_check_branch
    %13 = sbr.rel (0) target = $region5
  $region4: #{dual_output_nn.1} parent=0 // pred_region
    _
  $region5: #{dual_output_nn.1} parent=0 // pred_fallthru
    _
  // Predicated region
  $region6: #{dual_output_nn.1} parent=0 // pred_check
    _
  $region7: #{dual_output_nn.1} parent=0 // pred_check_branch
    %15 = sbr.rel (0) target = $region9
  $region8: #{dual_output_nn.1} parent=0 // pred_region
    _
  $region9: #{dual_output_nn.1} parent=0 // pred_fallthru
    _
  // Predicated region
  $region10: #{dual_output_nn.1} parent=0 // pred_check
    _
  $region11: #{dual_output_nn.1} parent=0 // pred_check_branch
    %17 = sbr.rel (0) target = $region13
  $region12: #{dual_output_nn.1} parent=0 // pred_region
    _
  $region13: #{dual_output_nn.1} parent=0 // pred_fallthru
    _
  // Predicated region
  $region14: #{dual_output_nn.1} parent=0 // pred_check
    _
  $region15: #{dual_output_nn.1} parent=0 // pred_check_branch
    %19 = sbr.rel (0) target = $region17
  $region16: #{dual_output_nn.1} parent=0 // pred_region
    _
  $region17: #{dual_output_nn.1} parent=0 // pred_fallthru
    _
  // Predicated region
  $region18: #{dual_output_nn.1} parent=0 // pred_check
    _
  $region19: #{dual_output_nn.1} parent=0 // pred_check_branch
    %21 = sbr.rel (0) target = $region21
  $region20: #{dual_output_nn.1} parent=0 // pred_region
    _
  $region21: #{dual_output_nn.1} parent=0 // pred_fallthru
    _
  // Predicated region
  $region22: #{dual_output_nn.1} parent=0 // pred_check
    _
  $region23: #{dual_output_nn.1} parent=0 // pred_check_branch
    %23 = sbr.rel (0) target = $region25
  $region24: #{dual_output_nn.1} parent=0 // pred_region
    _
  $region25: #{dual_output_nn.1} parent=0 // pred_fallthru
    _
  // Predicated region
  $region26: #{dual_output_nn.1} parent=0 // pred_check
    _
  $region27: #{dual_output_nn.1} parent=0 // pred_check_branch
    %25 = sbr.rel (0) target = $region29
  $region28: #{dual_output_nn.1} parent=0 // pred_region
    _
  $region29: #{dual_output_nn.1} parent=0 // pred_fallthru
    _
  %v27 = vld [vmem:[%s0] sm:$0xff]
  %v28 = vpack.c.bf16 %v27, %v27
  %v29 = vld [vmem:[%s1] sm:$0xf]
  %v30 = vld [vmem:[%s1 + $0x4] sm:$0xf]
  %v31 = vld [vmem:[%s2] sm:$0x1]
  %v33 = vlaneseq
  %v34 = vshrl.u32 %v33, 7
  %v35 = vsub.s32 0, %v34
  %v36 = vrot.slane %v31, %v35
  %v40 = vunpack.c.l.b16 %v29
  %v41 = vunpack.c.l.b16 %v30
  %v42 = vpack.c.b16 %v41, %v40
  %vm44 = vcmask 130048
  %v46 = vsel %vm44, %v28, 0
  %48 = vmatprep.subr.bf16.mxu0 0
  %49 = vmatpush1.bf16.msra.mxu0 %v42
  %50 = vmatprep.subr.bf16.mxu0 0
  %51 = vmatpush1.bf16.msra.mxu0 0
  %52 = vmatprep.subr.bf16.mxu0 0
  %53 = vmatpush1.bf16.msra.mxu0 0
  %54 = vmatprep.subr.bf16.mxu0 0
  %55 = vmatpush1.bf16.msra.mxu0 0
  %56 = vmatprep.subr.bf16.mxu0 0
  %57 = vmatpush1.bf16.msra.mxu0 0
  %58 = vmatprep.subr.bf16.mxu0 0
  %59 = vmatpush1.bf16.msra.mxu0 0
  %60 = vmatprep.subr.bf16.mxu0 0
  %61 = vmatpush1.bf16.msra.mxu0 0
  %62 = vmatprep.subr.bf16.mxu0 0
  %63 = vmatpush1.bf16.msra.mxu0 0
  %64 = vmatprep.subr.bf16.mxu0 0
  %65 = vmatpush1.bf16.msra.mxu0 0
  %66 = vmatprep.subr.bf16.mxu0 0
  %67 = vmatpush1.bf16.msra.mxu0 0
  %68 = vmatprep.subr.bf16.mxu0 0
  %69 = vmatpush1.bf16.msra.mxu0 0
  %70 = vmatprep.subr.bf16.mxu0 0
  %71 = vmatpush1.bf16.msra.mxu0 0
  %72 = vmatprep.subr.bf16.mxu0 0
  %73 = vmatpush1.bf16.msra.mxu0 0
  %74 = vmatprep.subr.bf16.mxu0 0
  %75 = vmatpush1.bf16.msra.mxu0 0
  %76 = vmatprep.subr.bf16.mxu0 0
  %77 = vmatpush1.bf16.msra.mxu0 0
  %78 = vmatprep.subr.bf16.mxu0 0
  %79 = vmatpush1.bf16.msra.mxu0 0
  %80 = vmatprep.mubr.bf16.mxu0 0
  %81 = vmatmul.mubr.bf16.gmra.mrb[0].mxu0 %v46
  %v82 = vpop.f32.mrb[0].mxu0
  %v83 = vadd.f32 %v36, %v82
  %v84 = vpop.f32.mrb[0].mxu0
  %v85 = vpop.f32.mrb[0].mxu0
  %v86 = vpop.f32.mrb[0].mxu0
  %87 = vdwg.mxu0
  %v88 = vpack.c.bf16 %v83, %v83
  %v89 = vmax.bf16 %v88, 0
  %v90 = vld [vmem:[%s3] sm:$0xf]
  %v91 = vld [vmem:[%s3 + $0x4] sm:$0xf]
  %v92 = vld [vmem:[%s3 + $0x8] sm:$0xf]
  %v93 = vld [vmem:[%s3 + $0xc] sm:$0xf]
  %v94 = vld [vmem:[%s3 + $0x10] sm:$0xf]
  %v95 = vld [vmem:[%s3 + $0x14] sm:$0xf]
  %v96 = vld [vmem:[%s3 + $0x18] sm:$0xf]
  %v97 = vld [vmem:[%s3 + $0x1c] sm:$0xf]
  %v98 = vld [vmem:[%s4] sm:$0x1]
  %v100 = vlaneseq
  %v101 = vshrl.u32 %v100, 7
  %v102 = vsub.s32 0, %v101
  %v103 = vrot.slane %v98, %v102
  %v113 = vunpack.c.l.b16 %v90
  %v114 = vunpack.c.l.b16 %v91
  %v115 = vunpack.c.l.b16 %v92
  %v116 = vunpack.c.l.b16 %v93
  %v117 = vunpack.c.l.b16 %v94
  %v118 = vunpack.c.l.b16 %v95
  %v119 = vunpack.c.l.b16 %v96
  %v120 = vunpack.c.l.b16 %v97
  %v121 = vpack.c.b16 %v114, %v113
  %v122 = vpack.c.b16 %v116, %v115
  %v123 = vpack.c.b16 %v118, %v117
  %v124 = vpack.c.b16 %v120, %v119
  %vm129 = vcmask 523264
  %v131 = vsel %vm129, %v89, 0
  %133 = vmatprep.subr.bf16.mxu0 0
  %134 = vmatpush1.bf16.msra.mxu0 %v121
  %135 = vmatprep.subr.bf16.mxu0 0
  %136 = vmatpush1.bf16.msra.mxu0 %v122
  %137 = vmatprep.subr.bf16.mxu0 0
  %138 = vmatpush1.bf16.msra.mxu0 %v123
  %139 = vmatprep.subr.bf16.mxu0 0
  %140 = vmatpush1.bf16.msra.mxu0 %v124
  %141 = vmatprep.subr.bf16.mxu0 0
  %142 = vmatpush1.bf16.msra.mxu0 0
  %143 = vmatprep.subr.bf16.mxu0 0
  %144 = vmatpush1.bf16.msra.mxu0 0
  %145 = vmatprep.subr.bf16.mxu0 0
  %146 = vmatpush1.bf16.msra.mxu0 0
  %147 = vmatprep.subr.bf16.mxu0 0
  %148 = vmatpush1.bf16.msra.mxu0 0
  %149 = vmatprep.subr.bf16.mxu0 0
  %150 = vmatpush1.bf16.msra.mxu0 0
  %151 = vmatprep.subr.bf16.mxu0 0
  %152 = vmatpush1.bf16.msra.mxu0 0
  %153 = vmatprep.subr.bf16.mxu0 0
  %154 = vmatpush1.bf16.msra.mxu0 0
  %155 = vmatprep.subr.bf16.mxu0 0
  %156 = vmatpush1.bf16.msra.mxu0 0
  %157 = vmatprep.subr.bf16.mxu0 0
  %158 = vmatpush1.bf16.msra.mxu0 0
  %159 = vmatprep.subr.bf16.mxu0 0
  %160 = vmatpush1.bf16.msra.mxu0 0
  %161 = vmatprep.subr.bf16.mxu0 0
  %162 = vmatpush1.bf16.msra.mxu0 0
  %163 = vmatprep.subr.bf16.mxu0 0
  %164 = vmatpush1.bf16.msra.mxu0 0
  %165 = vmatprep.mubr.bf16.mxu0 0
  %166 = vmatmul.mubr.bf16.gmra.mrb[0].mxu0 %v131
  %v167 = vpop.f32.mrb[0].mxu0
  %v168 = vadd.f32 %v103, %v167
  %v169 = vpop.f32.mrb[0].mxu0
  %v170 = vpop.f32.mrb[0].mxu0
  %v171 = vpop.f32.mrb[0].mxu0
  %172 = vdwg.mxu0
  %v173 = vpack.c.bf16 %v168, %v168
  %v174 = vmax.bf16 %v173, 0
  %v175 = vld [vmem:[%s5] sm:$0xf]
  %v176 = vld [vmem:[%s5 + $0x4] sm:$0xf]
  %v177 = vld [vmem:[%s5 + $0x8] sm:$0xf]
  %v178 = vld [vmem:[%s5 + $0xc] sm:$0xf]
  %v179 = vld [vmem:[%s6] sm:$0x1]
  %v181 = vlaneseq
  %v182 = vshrl.u32 %v181, 7
  %v183 = vsub.s32 0, %v182
  %v184 = vrot.slane %v179, %v183
  %v190 = vunpack.c.l.b16 %v175
  %v191 = vunpack.c.l.b16 %v176
  %v192 = vunpack.c.l.b16 %v177
  %v193 = vunpack.c.l.b16 %v178
  %v194 = vpack.c.b16 %v191, %v190
  %v195 = vpack.c.b16 %v193, %v192
  %vm198 = vcmask 261120
  %v200 = vsel %vm198, %v174, 0
  %202 = vmatprep.subr.bf16.mxu0 0
  %203 = vmatpush1.bf16.msra.mxu0 %v194
  %204 = vmatprep.subr.bf16.mxu0 0
  %205 = vmatpush1.bf16.msra.mxu0 %v195
  %206 = vmatprep.subr.bf16.mxu0 0
  %207 = vmatpush1.bf16.msra.mxu0 0
  %208 = vmatprep.subr.bf16.mxu0 0
  %209 = vmatpush1.bf16.msra.mxu0 0
  %210 = vmatprep.subr.bf16.mxu0 0
  %211 = vmatpush1.bf16.msra.mxu0 0
  %212 = vmatprep.subr.bf16.mxu0 0
  %213 = vmatpush1.bf16.msra.mxu0 0
  %214 = vmatprep.subr.bf16.mxu0 0
  %215 = vmatpush1.bf16.msra.mxu0 0
  %216 = vmatprep.subr.bf16.mxu0 0
  %217 = vmatpush1.bf16.msra.mxu0 0
  %218 = vmatprep.subr.bf16.mxu0 0
  %219 = vmatpush1.bf16.msra.mxu0 0
  %220 = vmatprep.subr.bf16.mxu0 0
  %221 = vmatpush1.bf16.msra.mxu0 0
  %222 = vmatprep.subr.bf16.mxu0 0
  %223 = vmatpush1.bf16.msra.mxu0 0
  %224 = vmatprep.subr.bf16.mxu0 0
  %225 = vmatpush1.bf16.msra.mxu0 0
  %226 = vmatprep.subr.bf16.mxu0 0
  %227 = vmatpush1.bf16.msra.mxu0 0
  %228 = vmatprep.subr.bf16.mxu0 0
  %229 = vmatpush1.bf16.msra.mxu0 0
  %230 = vmatprep.subr.bf16.mxu0 0
  %231 = vmatpush1.bf16.msra.mxu0 0
  %232 = vmatprep.subr.bf16.mxu0 0
  %233 = vmatpush1.bf16.msra.mxu0 0
  %234 = vmatprep.mubr.bf16.mxu0 0
  %235 = vmatmul.mubr.bf16.gmra.mrb[0].mxu0 %v200
  %v236 = vpop.f32.mrb[0].mxu0
  %v237 = vadd.f32 %v184, %v236
  %v238 = vpop.f32.mrb[0].mxu0
  %v239 = vpop.f32.mrb[0].mxu0
  %v240 = vpop.f32.mrb[0].mxu0
  %241 = vdwg.mxu0
  %vm242 = vcmask 64512
  %243 = vst.msk [vmem:[%s7] sm:$0xff] %vm242, %v237
  // Predicated region
  $region30: #{dual_output_nn.1} parent=0 // pred_check
    _
  $region31: #{dual_output_nn.1} parent=0 // pred_check_branch
    %245 = sbr.rel (0) target = $region33
  $region32: #{dual_output_nn.1} parent=0 // pred_region
    _
  $region33: #{dual_output_nn.1} parent=0 // pred_fallthru
    _
  // Predicated region
  $region34: #{dual_output_nn.1} parent=0 // pred_check
    _
  $region35: #{dual_output_nn.1} parent=0 // pred_check_branch
    %247 = sbr.rel (0) target = $region37
  $region36: #{dual_output_nn.1} parent=0 // pred_region
    _
  $region37: #{dual_output_nn.1} parent=0 // pred_fallthru
    _

</llo_original>
